<compile_context>
chip_gen: v7x
topology: tpu7x:2x2x1
jax: 0.10.0
libtpu: 0.0.40
codegen_flags: <defaults>
</compile_context>

<pallas_src>
import functools

import jax
import jax.numpy as jnp
from jax.experimental import pallas as pl
from jax.experimental.pallas import tpu as pltpu


def _round_up(x, m):
    return (x + m - 1) // m * m


def _pick_row_tile(M, preferred=512):
    """Pick (row_tile, padded_M), preferring a large tile that divides M exactly
    so no row-padding pass over X is needed.  `preferred` should be a multiple
    of 128 (256/512 recommended for v6e/v7x)."""
    if M <= preferred:
        t = _round_up(M, 8)      # single tile; at most 7 rows of padding
        return t, t
    for t in (preferred, 512, 384, 256, 128):
        if M % t == 0:
            return t, M
    # Fallback: pad the row axis to a multiple of the preferred tile.
    return preferred, _round_up(M, preferred)


# ---------------------------------------------------------------------------
# Pallas kernel: tiled (rows x embed-cols) matmul + bias
# ---------------------------------------------------------------------------
def _matmul_bias_kernel(x_ref, w_ref, b_ref, o_ref, *, mxu_dtype):
    # x_ref: (tm, K)  w_ref: (K, tn)  b_ref: (1, tn)  o_ref: (tm, tn)
    x = x_ref[...]
    w = w_ref[...]
    if mxu_dtype is not None:
        # Cast at the MXU boundary only (f32 operands take a slow multi-pass
        # MXU path); W is already pre-cast at init so its astype is a no-op.
        x = x.astype(mxu_dtype)
        w = w.astype(mxu_dtype)
    acc = jnp.dot(x, w, preferred_element_type=jnp.float32)
    o_ref[...] = (acc + b_ref[...]).astype(o_ref.dtype)


def matmul_bias(x, w, b, *, tm_preferred=512, mxu_dtype=jnp.bfloat16):
    """y = x @ w + b with a Pallas kernel.

    x: (M, K) float32, w: (K, E_pad), b: (1, E_pad) float32, E_pad % 128 == 0.
    Returns (M, E_pad) in x.dtype.
    """
    M, K = x.shape
    K2, E_pad = w.shape
    assert K == K2, (K, K2)
    assert E_pad % 128 == 0, E_pad
    assert b.shape == (1, E_pad), b.shape

    tm, M_pad = _pick_row_tile(M, tm_preferred)
    if M_pad != M:
        x = jnp.pad(x, ((0, M_pad - M), (0, 0)))

    # Lane-dense output tile: full E_pad when small, else 256/128-wide columns.
    if E_pad <= 512:
        tn = E_pad
    else:
        tn = 256 if E_pad % 256 == 0 else 128
    n_m = M_pad // tm
    n_n = E_pad // tn

    kernel = functools.partial(_matmul_bias_kernel, mxu_dtype=mxu_dtype)
    out = pl.pallas_call(
        kernel,
        out_shape=jax.ShapeDtypeStruct((M_pad, E_pad), x.dtype),
        grid_spec=pltpu.PrefetchScalarGridSpec(
            num_scalar_prefetch=0,
            grid=(n_m, n_n),
            in_specs=[
                pl.BlockSpec((tm, K), lambda i, j: (i, 0)),   # row tile of X
                pl.BlockSpec((K, tn), lambda i, j: (0, j)),   # column slab of W
                pl.BlockSpec((1, tn), lambda i, j: (0, j)),   # bias slab
            ],
            out_specs=pl.BlockSpec((tm, tn), lambda i, j: (i, j)),
        ),
        compiler_params=pltpu.CompilerParams(
            # No reduction grid axis -> both axes parallel (v7x 2-TC sharding).
            dimension_semantics=("parallel", "parallel"),
        ),
    )(x, w, b)
    if M_pad != M:
        out = out[:M]
    return out


# ---------------------------------------------------------------------------
# Embed module (JAX / Pallas)
# ---------------------------------------------------------------------------
class EmbedPallas:
    def __init__(self, channels, embed_dim, channel_kernel_size=None, *, key,
                 mxu_dtype=jnp.bfloat16, tm_preferred=512):
        self.channels = channels
        self.embed_dim = embed_dim
        self.channel_kernel_size = channel_kernel_size
        self.mxu_dtype = mxu_dtype
        self.tm_preferred = tm_preferred
        self.embed_pad = _round_up(embed_dim, 128)   # lane-dense store width

        k_w, k_b = jax.random.split(key)
        if channel_kernel_size:
            k = channel_kernel_size
            # nn.Conv2d(1, E, kernel_size=(1,k), stride=(1,k)) weight: (E,1,1,k)
            conv_w = jax.random.normal(k_w, (embed_dim, 1, 1, k), jnp.float32) * 0.02
            w = conv_w.reshape(embed_dim, k).T                # (k, E)
            b = jax.random.normal(k_b, (embed_dim,), jnp.float32) * 0.02
            self.padding = channels % k // 2                  # matches PyTorch init
            self.patches = (channels + 2 * self.padding - k) // k + 1
        else:
            # nn.Linear(channels, embed_dim) weight: (E, C)
            lin_w = jax.random.normal(k_w, (embed_dim, channels), jnp.float32) * 0.02
            w = lin_w.T                                       # (C, E)
            b = jax.random.normal(k_b, (embed_dim,), jnp.float32) * 0.02

        # Keep unpadded f32 params for the pure-JAX reference.
        self.w_unpadded, self.b_unpadded = w, b
        # Pad embed axis once at init so kernel stores are full-lane, and
        # pre-cast W to the MXU dtype (halves W HBM traffic; bias stays f32
        # because it is added to the f32 accumulator).
        ep = self.embed_pad - embed_dim
        w_padded = jnp.pad(w, ((0, 0), (0, ep)))
        self.w = w_padded.astype(mxu_dtype) if mxu_dtype is not None else w_padded
        self.b = jnp.pad(b, (0, ep)).reshape(1, self.embed_pad)

    def __call__(self, x):
        """x: (B, T, C) -> (B, T, E) or (B, P, T, E) if channel_kernel_size."""
        B, T, C = x.shape
        E, E_pad = self.embed_dim, self.embed_pad
        if self.channel_kernel_size:
            k = self.channel_kernel_size
            pad, P = self.padding, self.patches
            # Conv2d (1,k)/(1,k) over channels == per-channel-patch linear map.
            # Rearrange the small input to (B, P, T, k) so the kernel's output
            # already has the module's (B, P, T, E) layout (no output permute).
            if pad != 0 or P * k != C + 2 * pad:
                x = jnp.pad(x, ((0, 0), (0, 0), (pad, pad)))[:, :, : P * k]
            patches = x.reshape(B, T, P, k).transpose(0, 2, 1, 3)   # (B, P, T, k)
            y = matmul_bias(patches.reshape(B * P * T, k), self.w, self.b,
                            tm_preferred=self.tm_preferred,
                            mxu_dtype=self.mxu_dtype)
            y = y.reshape(B, P, T, E_pad)
            return y[..., :E] if E_pad != E else y
        else:
            y = matmul_bias(x.reshape(B * T, C), self.w, self.b,
                            tm_preferred=self.tm_preferred,
                            mxu_dtype=self.mxu_dtype)
            y = y.reshape(B, T, E_pad)
            return y[..., :E] if E_pad != E else y


# ---------------------------------------------------------------------------
# Pure-JAX references for verification
# ---------------------------------------------------------------------------
def _ref_forward(module: EmbedPallas, x):
    B, T, C = x.shape
    w, b = module.w_unpadded, module.b_unpadded
    if module.channel_kernel_size:
        k, pad, P = module.channel_kernel_size, module.padding, module.patches
        x_pad = jnp.pad(x, ((0, 0), (0, 0), (pad, pad)))
        patches = x_pad[:, :, : P * k].reshape(B, T, P, k)
        y = jnp.einsum("btpk,ke->btpe", patches, w) + b
        return jnp.transpose(y, (0, 2, 1, 3))     # (B, P, T, E)
    else:
        return jnp.einsum("btc,ce->bte", x, w) + b


if __name__ == "__main__":
    key = jax.random.PRNGKey(0)
    k_x, k_x2, k_m1, k_m2, k_m3 = jax.random.split(key, 5)

    B, T, C, E = 2, 8, 16, 32
    x = jax.random.normal(k_x, (B, T, C), jnp.float32)

    # --- Linear mode (channel_kernel_size=None): (B, T, C) -> (B, T, E) -----
    embed_lin = EmbedPallas(C, E, channel_kernel_size=None, key=k_m1)
    out_lin = jax.block_until_ready(embed_lin(x))
    assert out_lin.shape == (B, T, E), out_lin.shape
    ref_lin = _ref_forward(embed_lin, x)
    assert jnp.allclose(out_lin, ref_lin, atol=1e-2, rtol=1e-2), float(
        jnp.max(jnp.abs(out_lin - ref_lin)))

    # Bit-exact f32 MXU path check.
    embed_lin_f32 = EmbedPallas(C, E, channel_kernel_size=None, key=k_m1,
                                mxu_dtype=jnp.float32)
    out_lin_f32 = jax.block_until_ready(embed_lin_f32(x))
    assert jnp.allclose(out_lin_f32, ref_lin, atol=1e-5, rtol=1e-5)

    # --- Conv mode (channel_kernel_size=4, pad=0): (B, T, C) -> (B, P, T, E) -
    ks = 4
    embed_conv = EmbedPallas(C, E, channel_kernel_size=ks, key=k_m2)
    out_conv = jax.block_until_ready(embed_conv(x))
    P = embed_conv.patches
    assert out_conv.shape == (B, P, T, E), out_conv.shape
    ref_conv = _ref_forward(embed_conv, x)
    assert jnp.allclose(out_conv, ref_conv, atol=1e-2, rtol=1e-2), float(
        jnp.max(jnp.abs(out_conv - ref_conv)))

    # --- Conv mode with nonzero PyTorch-style padding (C=18, k=4 -> pad=1) ---
    C2 = 18
    x2 = jax.random.normal(k_x2, (B, T, C2), jnp.float32)
    embed_conv_pad = EmbedPallas(C2, E, channel_kernel_size=ks, key=k_m3)
    out_conv_pad = jax.block_until_ready(embed_conv_pad(x2))
    P2 = embed_conv_pad.patches
    assert out_conv_pad.shape == (B, P2, T, E), out_conv_pad.shape
    ref_conv_pad = _ref_forward(embed_conv_pad, x2)
    assert jnp.allclose(out_conv_pad, ref_conv_pad, atol=1e-2, rtol=1e-2), float(
        jnp.max(jnp.abs(out_conv_pad - ref_conv_pad)))

    print("KERNEL_OK")
</pallas_src>

<mosaic_0001>
module attributes {stable_mosaic.version = 11 : i64} {
  func.func @_matmul_bias_kernel(%arg0: i32, %arg1: i32, %arg2: memref<16x16xf32, #tpu.memory_space<vmem>>, %arg3: memref<16x128xbf16, #tpu.memory_space<vmem>>, %arg4: memref<1x128xf32, #tpu.memory_space<vmem>>, %arg5: memref<16x128xf32, #tpu.memory_space<vmem>>) attributes {dimension_semantics = [#tpu.dimension_semantics<parallel>, #tpu.dimension_semantics<parallel>], iteration_bounds = array<i64: 1, 1>, scalar_prefetch = 0 : i64, scratch_operands = 0 : i64, tpu.core_type = #tpu.core_type<tc>, window_params = [{transform_indices = @transform_0, window_bounds = array<i64: 16, 16>}, {transform_indices = @transform_1, window_bounds = array<i64: 16, 128>}, {transform_indices = @transform_2, window_bounds = array<i64: 1, 128>}, {transform_indices = @transform_3, window_bounds = array<i64: 16, 128>}]} {
    %c0 = arith.constant 0 : index
    %c0_0 = arith.constant 0 : index
    %0 = vector.load %arg2[%c0, %c0_0] : memref<16x16xf32, #tpu.memory_space<vmem>>, vector<16x16xf32>
    %c0_1 = arith.constant 0 : index
    %c0_2 = arith.constant 0 : index
    %1 = vector.load %arg3[%c0_1, %c0_2] : memref<16x128xbf16, #tpu.memory_space<vmem>>, vector<16x128xbf16>
    %2 = arith.truncf %0 : vector<16x16xf32> to vector<16x16xbf16>
    %cst = arith.constant dense<0.000000e+00> : vector<16x128xf32>
    %3 = tpu.matmul %2, %1, %cst {dimension_numbers = #tpu.dot_dimension_numbers<[1], [0], [0], [1], [0, 0, 1, 1], [], []>} : vector<16x16xbf16>, vector<16x128xbf16>, vector<16x128xf32> -> vector<16x128xf32>
    %c0_3 = arith.constant 0 : index
    %c0_4 = arith.constant 0 : index
    %4 = vector.load %arg4[%c0_3, %c0_4] : memref<1x128xf32, #tpu.memory_space<vmem>>, vector<1x128xf32>
    %5 = vector.broadcast %4 : vector<1x128xf32> to vector<16x128xf32>
    %6 = arith.addf %3, %5 : vector<16x128xf32>
    %c0_5 = arith.constant 0 : index
    %c0_6 = arith.constant 0 : index
    %7 = vector.load %arg5[%c0_5, %c0_6] : memref<16x128xf32, #tpu.memory_space<vmem>>, vector<16x128xf32>
    tpu.vector_store %arg5[%c0_5, %c0_6], %6 {strides = array<i32>} : memref<16x128xf32, #tpu.memory_space<vmem>>, vector<16x128xf32>,
    return
  }
  func.func @transform_0(%arg0: i32, %arg1: i32) -> (i32, i32) {
    %c0_i32 = arith.constant 0 : i32
    %c0_i32_0 = arith.constant 0 : i32
    return %arg0, %c0_i32 : i32, i32
  }
  func.func @transform_1(%arg0: i32, %arg1: i32) -> (i32, i32) {
    %c0_i32 = arith.constant 0 : i32
    %c0_i32_0 = arith.constant 0 : i32
    return %c0_i32, %arg1 : i32, i32
  }
  func.func @transform_2(%arg0: i32, %arg1: i32) -> (i32, i32) {
    %c0_i32 = arith.constant 0 : i32
    %c0_i32_0 = arith.constant 0 : i32
    return %c0_i32, %arg1 : i32, i32
  }
  func.func @transform_3(%arg0: i32, %arg1: i32) -> (i32, i32) {
    %c0_i32 = arith.constant 0 : i32
    return %arg0, %arg1 : i32, i32
  }
}

</mosaic_0001>

<llo_original>
// kernel: tpu_custom_call.1
$region0: #{tpu_custom_call.1}
  #allocation0 [shape = 'u32[]', space=smem, size = 0x4, offset = 0x4, fixed_abs, tag = 'smem constant byte address 0x4 - core index']
  #allocation1 [shape = 'u32[144,128]{1,0:T(1,128)}', space=vmem, size = 0x12000, scoped, tag = 'internal scratch']
  %s0 = inlined_call_operand.hbm [shape: f32[16,16], index: 0, kind: input, shape index: {}]
  %s1 = inlined_call_operand.hbm [shape: bf16[16,128], index: 1, kind: input, shape index: {}]
  %s2 = inlined_call_operand.vmem [shape: f32[1,128], index: 2, kind: input, shape index: {}]
  %s3 = inlined_call_operand.hbm [shape: f32[16,128], index: 3, kind: output, shape index: {}]
  %s4 = sld [smem:[#allocation0]]
  $region30: #{tpu_custom_call.1} parent=0
    _
  %s6 = ssub.s32 1, %s4
  %s7 = scalar_select 0, %s6, %s4
  $region1: #{tpu_custom_call.1} parent=0
    #allocation2 [shape = 'u8[8192]{0}', space=vmem, size = 0x2000, scoped, tag = 'input window, operand 0, single buffered']
    #allocation3 [shape = 's32[1]{0}', space=sflag, size = 0x4, scoped, tag = 'scoped memory for tpu_custom_call.1']
    #allocation4 [shape = 's32[1]{0}', space=sflag, size = 0x4, scoped, tag = 'scoped memory for tpu_custom_call.1']
    #allocation5 [shape = 'u8[4096]{0}', space=vmem, size = 0x1000, scoped, tag = 'input window, operand 1, single buffered']
    #allocation6 [shape = 's32[1]{0}', space=sflag, size = 0x4, scoped, tag = 'scoped memory for tpu_custom_call.1']
    #allocation7 [shape = 'u8[8192]{0}', space=vmem, size = 0x2000, scoped, tag = 'output window, operand 0, single buffered']
    %8 = vsyncpa [#allocation3], 0
    %9 = vsyncpa [#allocation6], 0
    %10 = vsyncpa [#allocation4], 0
    // Predicated region
    $region2: #{tpu_custom_call.1} parent=1 // pred_check
      _
    $region3: #{tpu_custom_call.1} parent=1 // pred_check_branch
      %12 = sbr.rel (0) target = $region5
    $region4: #{tpu_custom_call.1} parent=1 // pred_region
      %s14 = ssub.s32 256, 256
      %15 = vsyncadd [#allocation3], %s14
      %s16 = sshll.u32 [#allocation2], 4
      %s17 = int_to_ptr.vmem [resolvable:$true] %s16
      %22 = dma.hbm_to_vmem [thread:$0]  %s0, 256, %s17, [#allocation3], 128, 128, 8
    $region5: #{tpu_custom_call.1} parent=1 // pred_fallthru
      _
    // Predicated region
    $region6: #{tpu_custom_call.1} parent=1 // pred_check
      _
    $region7: #{tpu_custom_call.1} parent=1 // pred_check_branch
      %24 = sbr.rel (0) target = $region9
    $region8: #{tpu_custom_call.1} parent=1 // pred_region
      %s26 = ssub.s32 128, 128
      %27 = vsyncadd [#allocation6], %s26
      %s28 = sshll.u32 [#allocation5], 4
      %s29 = int_to_ptr.vmem [resolvable:$true] %s28
      %34 = dma.hbm_to_vmem [thread:$0]  %s1, 128, %s29, [#allocation6], 64, 64, 4
    $region9: #{tpu_custom_call.1} parent=1 // pred_fallthru
      _
    // Predicated region
    $region10: #{tpu_custom_call.1} parent=1 // pred_check
      _
    $region11: #{tpu_custom_call.1} parent=1 // pred_check_branch
      %36 = sbr.rel (0) target = $region13
    $region12: #{tpu_custom_call.1} parent=1 // pred_region
      _
    $region13: #{tpu_custom_call.1} parent=1 // pred_fallthru
      _
    // Predicated region
    $region14: #{tpu_custom_call.1} parent=1 // pred_check
      _
    $region15: #{tpu_custom_call.1} parent=1 // pred_check_branch
      %38 = sbr.rel (0) target = $region17
    $region16: #{tpu_custom_call.1} parent=1 // pred_region
      %39 = dma.done [#allocation3], 256
    $region17: #{tpu_custom_call.1} parent=1 // pred_fallthru
      _
    // Predicated region
    $region18: #{tpu_custom_call.1} parent=1 // pred_check
      _
    $region19: #{tpu_custom_call.1} parent=1 // pred_check_branch
      %41 = sbr.rel (0) target = $region21
    $region20: #{tpu_custom_call.1} parent=1 // pred_region
      %42 = dma.done [#allocation6], 128
    $region21: #{tpu_custom_call.1} parent=1 // pred_fallthru
      _
    %v44 = vld [vmem:[#allocation2] sm:$0xff]
    %v45 = vld [vmem:[#allocation2 + $0x8] sm:$0xff]
    %v46 = vld [vmem:[#allocation5] sm:$0xf]
    %v47 = vld [vmem:[#allocation5 + $0x4] sm:$0xf]
    %v48 = vpack.c.bf16 %v45, %v44
    %v49 = vld [vmem:[%s2] sm:$0x1]
    %v51 = vlaneseq
    %v52 = vshrl.u32 %v51, 7
    %v53 = vsub.s32 0, %v52
    %v54 = vrot.slane %v49, %v53
    %v58 = vunpack.c.l.b16 %v46
    %v59 = vunpack.c.l.b16 %v47
    %v60 = vpack.c.b16 %v59, %v58
    %vm62 = vcmask 130048
    %v64 = vsel %vm62, %v48, 0
    %66 = vmatprep.subr.bf16.mxu0 0
    %67 = vmatpush1.bf16.msra.mxu0 %v60
    %68 = vmatprep.subr.bf16.mxu0 0
    %69 = vmatpush1.bf16.msra.mxu0 0
    %70 = vmatprep.subr.bf16.mxu0 0
    %71 = vmatpush1.bf16.msra.mxu0 0
    %72 = vmatprep.subr.bf16.mxu0 0
    %73 = vmatpush1.bf16.msra.mxu0 0
    %74 = vmatprep.subr.bf16.mxu0 0
    %75 = vmatpush1.bf16.msra.mxu0 0
    %76 = vmatprep.subr.bf16.mxu0 0
    %77 = vmatpush1.bf16.msra.mxu0 0
    %78 = vmatprep.subr.bf16.mxu0 0
    %79 = vmatpush1.bf16.msra.mxu0 0
    %80 = vmatprep.subr.bf16.mxu0 0
    %81 = vmatpush1.bf16.msra.mxu0 0
    %82 = vmatprep.subr.bf16.mxu0 0
    %83 = vmatpush1.bf16.msra.mxu0 0
    %84 = vmatprep.subr.bf16.mxu0 0
    %85 = vmatpush1.bf16.msra.mxu0 0
    %86 = vmatprep.subr.bf16.mxu0 0
    %87 = vmatpush1.bf16.msra.mxu0 0
    %88 = vmatprep.subr.bf16.mxu0 0
    %89 = vmatpush1.bf16.msra.mxu0 0
    %90 = vmatprep.subr.bf16.mxu0 0
    %91 = vmatpush1.bf16.msra.mxu0 0
    %92 = vmatprep.subr.bf16.mxu0 0
    %93 = vmatpush1.bf16.msra.mxu0 0
    %94 = vmatprep.subr.bf16.mxu0 0
    %95 = vmatpush1.bf16.msra.mxu0 0
    %96 = vmatprep.subr.bf16.mxu0 0
    %97 = vmatpush1.bf16.msra.mxu0 0
    %98 = vmatprep.mubr.bf16.mxu0 0
    %99 = vmatmul.mubr.bf16.gmra.mrb[0].mxu0 %v64
    %v100 = vpop.f32.mrb[0].mxu0
    %v101 = vadd.f32 %v54, %v100
    %v102 = vpop.f32.mrb[0].mxu0
    %v103 = vpop.f32.mrb[0].mxu0
    %v104 = vadd.f32 %v54, %v103
    %v105 = vpop.f32.mrb[0].mxu0
    %106 = vdwg.mxu0
    %107 = vst [vmem:[#allocation7] sm:$0xff] %v101
    %108 = vst [vmem:[#allocation7 + $0x8] sm:$0xff] %v104
    // Predicated region
    $region22: #{tpu_custom_call.1} parent=1 // pred_check
      _
    $region23: #{tpu_custom_call.1} parent=1 // pred_check_branch
      %110 = sbr.rel (0) target = $region25
    $region24: #{tpu_custom_call.1} parent=1 // pred_region
      %s112 = ssub.s32 256, 256
      %113 = vsyncadd [#allocation4], %s112
      %s114 = sshll.u32 [#allocation7], 4
      %s115 = int_to_ptr.vmem [resolvable:$true] %s114
      %120 = dma.vmem_to_hbm [thread:$0]  %s115, 256, %s3, [#allocation4], 128, 128, 8
    $region25: #{tpu_custom_call.1} parent=1 // pred_fallthru
      _
    // Predicated region
    $region26: #{tpu_custom_call.1} parent=1 // pred_check
      _
    $region27: #{tpu_custom_call.1} parent=1 // pred_check_branch
      %122 = sbr.rel (0) target = $region29
    $region28: #{tpu_custom_call.1} parent=1 // pred_region
      %123 = dma.done [#allocation4], 256
    $region29: #{tpu_custom_call.1} parent=1 // pred_fallthru
      _
    %124 = vsyncpa [#allocation3], 1
    %125 = vsyncpa [#allocation6], 1
    %126 = vsyncpa [#allocation4], 1

</llo_original>
